<compile_context>
chip_gen: v5e
topology: v5e:2x2
jax: 0.10.0
libtpu: 0.0.40
codegen_flags: <defaults>
</compile_context>

<pallas_src>
import functools

import jax
import jax.numpy as jnp
from jax.experimental import pallas as pl
from jax.experimental.pallas import tpu as pltpu


def _round_up(x: int, m: int) -> int:
    return ((x + m - 1) // m) * m


def _pick_tile(n: int, max_tile: int) -> int:
    """Largest multiple of 128 that divides n and is <= max_tile (n % 128 == 0)."""
    max_tile = max(128, min(max_tile, n))
    best = 128
    t = 128
    while t <= max_tile:
        if n % t == 0:
            best = t
        t += 128
    return best


def _vmem_bytes(tm, tk, np_, fin_p, fout_p, itemsize, x_resident, support_first):
    """Rough double-buffered VMEM working-set estimate (bytes)."""
    adj_b = 2 * tm * tk * itemsize
    x_b = 2 * (np_ if x_resident else tk) * fin_p * itemsize
    w_b = 2 * fin_p * fout_p * itemsize
    bias_b = 2 * 8 * fout_p * 4
    out_b = 2 * tm * fout_p * itemsize
    acc_b = tm * (fout_p if support_first else fin_p) * 4
    rsum_b = tm * 128 * 4  # (tm, 1) scratch padded to full lanes
    return adj_b + x_b + w_b + bias_b + out_b + acc_b + rsum_b


def gcn_kernel(x_ref, adj_ref, w_ref, b_ref, out_ref, acc_ref, rowsum_ref,
               *, support_first: bool, x_resident: bool, tk: int):
    # x_ref:      (1, Np, Fin_p) if x_resident else (1, TK, Fin_p)
    # adj_ref:    (1, TM, TK)
    # w_ref:      (Fin_p, Fout_p)   W.T, zero padded, resident
    # b_ref:      (1, Fout_p)       bias (f32), resident
    # out_ref:    (1, TM, Fout_p)
    # acc_ref:    (TM, Fout_p) if support_first else (TM, Fin_p), f32
    # rowsum_ref: (TM, 1) f32       accumulates adj row sums (for the bias term)
    k = pl.program_id(2)
    nk = pl.num_programs(2)

    if x_resident:
        start = pl.multiple_of(k * tk, 128)
        x_blk = x_ref[0, pl.ds(start, tk), :]
    else:
        x_blk = x_ref[0]

    adj = adj_ref[0]

    if support_first:
        # (TK, Fin_p) @ (Fin_p, Fout_p) -> small per-step linear, then the big
        # O(N^2) matmul contracts against the smaller Fout_p slab.
        rhs = jnp.dot(x_blk, w_ref[...],
                      preferred_element_type=jnp.float32).astype(x_blk.dtype)
    else:
        rhs = x_blk

    prod = jnp.dot(adj, rhs, preferred_element_type=jnp.float32)
    rsum = jnp.sum(adj.astype(jnp.float32), axis=-1, keepdims=True)

    @pl.when(k == 0)
    def _init():
        # Write directly on the first k-step (no zero-fill pass).
        acc_ref[...] = prod
        rowsum_ref[...] = rsum

    @pl.when(k != 0)
    def _accumulate():
        acc_ref[...] += prod
        rowsum_ref[...] += rsum

    @pl.when(k == nk - 1)
    def _finalize():
        if support_first:
            out = acc_ref[...]
        else:
            out = jnp.dot(acc_ref[...], w_ref[...],
                          preferred_element_type=jnp.float32)
        # bias folded back in via adjacency row sums: adj @ (xW^T + b)
        #   = (adj @ xW^T) + (adj @ 1) * b
        out = out + rowsum_ref[...] * b_ref[...]
        out_ref[0] = jnp.maximum(out, 0.0).astype(out_ref.dtype)


@functools.partial(jax.jit, static_argnames=("compute_dtype",))
def gcn_layer(x, adj, weight, bias, *, compute_dtype=None):
    """x: (B, N, F_in), adj: (B, N, N), weight: (F_out, F_in), bias: (F_out,).

    compute_dtype: optional (e.g. jnp.bfloat16) to halve the adj/x HBM streams;
    accumulation stays f32.  Default keeps the input dtype (exact vs PyTorch).
    """
    B, N, F_in = x.shape
    F_out = weight.shape[0]
    out_dtype = x.dtype
    cdt = jnp.dtype(compute_dtype) if compute_dtype is not None else jnp.dtype(out_dtype)
    itemsize = cdt.itemsize

    # ---- padded sizes (feature dims to 128 lanes, nodes to 128 only) --------
    Fin_p = _round_up(F_in, 128)
    Fout_p = _round_up(F_out, 128)
    Np = _round_up(N, 128)

    # Contract against the smaller feature slab in the dominant O(N^2) matmul.
    support_first = Fout_p < Fin_p

    # Keep the whole per-batch x resident in VMEM when it comfortably fits
    # (DMA'd once per batch instead of once per (i, k) grid step).
    x_resident = 2 * Np * Fin_p * itemsize <= (8 << 20)

    # ---- tile selection ------------------------------------------------------
    TM = _pick_tile(Np, 1024)
    TK = _pick_tile(Np, 512)
    # v7x has 2 TensorCores: keep at least 2 programs on the parallel axes.
    if B * (Np // TM) < 2 and Np >= 256:
        TM = _pick_tile(Np, Np // 2)

    budget = 32 << 20  # safe working-set target across v5e/v6e/v7x
    while _vmem_bytes(TM, TK, Np, Fin_p, Fout_p, itemsize,
                      x_resident, support_first) > budget:
        if TM > 512:
            TM = _pick_tile(Np, TM // 2)
        elif x_resident:
            x_resident = False
        elif TM > 128:
            TM = _pick_tile(Np, TM // 2)
        elif TK > 128:
            TK = _pick_tile(Np, TK // 2)
        else:
            break

    est = _vmem_bytes(TM, TK, Np, Fin_p, Fout_p, itemsize, x_resident, support_first)
    vmem_limit = int(min(max(est + (16 << 20), 32 << 20), 64 << 20))

    # ---- pad inputs only when needed (adj is the dominant HBM stream; for
    # N % 128 == 0 it is passed through with no extra copy) -------------------
    x_c = x.astype(cdt)
    if (Np, Fin_p) != (N, F_in):
        x_c = jnp.pad(x_c, ((0, 0), (0, Np - N), (0, Fin_p - F_in)))

    adj_c = adj.astype(cdt)
    if Np != N:
        adj_c = jnp.pad(adj_c, ((0, 0), (0, Np - N), (0, Np - N)))

    w_p = weight.T.astype(cdt)
    if (Fin_p, Fout_p) != (F_in, F_out):
        w_p = jnp.pad(w_p, ((0, Fin_p - F_in), (0, Fout_p - F_out)))

    b_p = bias.astype(jnp.float32)[None, :]
    if Fout_p != F_out:
        b_p = jnp.pad(b_p, ((0, 0), (0, Fout_p - F_out)))

    # ---- specs ---------------------------------------------------------------
    grid = (B, Np // TM, Np // TK)

    if x_resident:
        x_spec = pl.BlockSpec((1, Np, Fin_p), lambda b, i, k: (b, 0, 0))
    else:
        x_spec = pl.BlockSpec((1, TK, Fin_p), lambda b, i, k: (b, k, 0))

    acc_cols = Fout_p if support_first else Fin_p

    kernel = functools.partial(gcn_kernel, support_first=support_first,
                               x_resident=x_resident, tk=TK)

    out_p = pl.pallas_call(
        kernel,
        out_shape=jax.ShapeDtypeStruct((B, Np, Fout_p), out_dtype),
        grid_spec=pltpu.PrefetchScalarGridSpec(
            num_scalar_prefetch=0,
            grid=grid,
            in_specs=[
                x_spec,
                pl.BlockSpec((1, TM, TK), lambda b, i, k: (b, i, k)),
                pl.BlockSpec((Fin_p, Fout_p), lambda b, i, k: (0, 0)),
                pl.BlockSpec((1, Fout_p), lambda b, i, k: (0, 0)),
            ],
            out_specs=pl.BlockSpec((1, TM, Fout_p), lambda b, i, k: (b, i, 0)),
            scratch_shapes=[
                pltpu.VMEM((TM, acc_cols), jnp.float32),
                pltpu.VMEM((TM, 1), jnp.float32),
            ],
        ),
        compiler_params=pltpu.CompilerParams(
            # batch / row-tile axes are independent (megacore sharding on v7x);
            # the reduction (K) axis is last and carries the accumulators.
            dimension_semantics=("parallel", "parallel", "arbitrary"),
            vmem_limit_bytes=vmem_limit,
        ),
    )(x_c, adj_c, w_p, b_p)

    return out_p[:, :N, :F_out]


def gcn_reference(x, adj, weight, bias):
    support = jnp.einsum("bnf,of->bno", x, weight) + bias
    out = jnp.einsum("bnm,bmo->bno", adj, support)
    return jnp.maximum(out, 0.0)


if __name__ == "__main__":
    def run_case(B, N, F_in, F_out, key):
        kx, ka, kw, kb = jax.random.split(key, 4)
        x = jax.random.normal(kx, (B, N, F_in), dtype=jnp.float32)
        adj = jax.random.uniform(ka, (B, N, N), dtype=jnp.float32)
        adj = adj / jnp.sum(adj, axis=-1, keepdims=True)  # row-normalized
        bound = 1.0 / (F_in ** 0.5)
        weight = jax.random.uniform(kw, (F_out, F_in), minval=-bound,
                                    maxval=bound, dtype=jnp.float32)
        bias = jax.random.uniform(kb, (F_out,), minval=-bound, maxval=bound,
                                  dtype=jnp.float32)

        out = jax.block_until_ready(gcn_layer(x, adj, weight, bias))
        ref = gcn_reference(x, adj, weight, bias)
        assert out.shape == (B, N, F_out)
        assert jnp.allclose(out, ref, atol=1e-4, rtol=1e-4), (
            f"mismatch vs reference for case {(B, N, F_in, F_out)}")

    key = jax.random.PRNGKey(0)
    k1, k2 = jax.random.split(key)
    run_case(2, 16, 8, 32, k1)    # acc-first path (Fin_p == Fout_p)
    run_case(2, 16, 256, 8, k2)   # support-first path (Fout_p < Fin_p)

    print("KERNEL_OK")
</pallas_src>

<mosaic_0001>
module attributes {stable_mosaic.version = 11 : i64} {
  func.func @gcn_kernel(%arg0: i32, %arg1: i32, %arg2: i32, %arg3: memref<1x128x128xf32, #tpu.memory_space<vmem>>, %arg4: memref<1x128x128xf32, #tpu.memory_space<vmem>>, %arg5: memref<128x128xf32, #tpu.memory_space<vmem>>, %arg6: memref<1x128xf32, #tpu.memory_space<vmem>>, %arg7: memref<1x128x128xf32, #tpu.memory_space<vmem>>, %arg8: memref<128x128xf32, #tpu.memory_space<vmem>>, %arg9: memref<128x1xf32, #tpu.memory_space<vmem>>) attributes {dimension_semantics = [#tpu.dimension_semantics<parallel>, #tpu.dimension_semantics<parallel>, #tpu.dimension_semantics<arbitrary>], iteration_bounds = array<i64: 2, 1, 1>, scalar_prefetch = 0 : i64, scratch_operands = 2 : i64, tpu.core_type = #tpu.core_type<tc>, window_params = [{transform_indices = @transform_0, window_bounds = array<i64: 1, 128, 128>}, {transform_indices = @transform_1, window_bounds = array<i64: 1, 128, 128>}, {pipeline_mode = #tpu.pipeline_mode<synchronous>, transform_indices = @transform_2, window_bounds = array<i64: 128, 128>}, {pipeline_mode = #tpu.pipeline_mode<synchronous>, transform_indices = @transform_3, window_bounds = array<i64: 1, 128>}, {transform_indices = @transform_4, window_bounds = array<i64: 1, 128, 128>}]} {
    %c128_i32 = arith.constant 128 : i32
    %0 = arith.muli %arg2, %c128_i32 : i32
    %1 = tpu.assume_multiple %0, 128 : i32
    %c0 = arith.constant 0 : index
    %2 = arith.index_cast %1 : i32 to index
    %c0_0 = arith.constant 0 : index
    %3 = vector.load %arg3[%c0, %2, %c0_0] : memref<1x128x128xf32, #tpu.memory_space<vmem>>, vector<1x128x128xf32>
    %4 = vector.shape_cast %3 : vector<1x128x128xf32> to vector<128x128xf32>
    %c0_1 = arith.constant 0 : index
    %c0_2 = arith.constant 0 : index
    %c0_3 = arith.constant 0 : index
    %5 = vector.load %arg4[%c0_1, %c0_2, %c0_3] : memref<1x128x128xf32, #tpu.memory_space<vmem>>, vector<1x128x128xf32>
    %6 = vector.shape_cast %5 : vector<1x128x128xf32> to vector<128x128xf32>
    %cst = arith.constant dense<0.000000e+00> : vector<128x128xf32>
    %7 = tpu.matmul %6, %4, %cst {dimension_numbers = #tpu.dot_dimension_numbers<[1], [0], [0], [1], [0, 0, 1, 1], [], []>} : vector<128x128xf32>, vector<128x128xf32>, vector<128x128xf32> -> vector<128x128xf32>
    %cst_4 = arith.constant dense<0.000000e+00> : vector<128xf32>
    %8 = vector.multi_reduction <add>, %6, %cst_4 [1] : vector<128x128xf32> to vector<128xf32>
    %9 = vector.shape_cast %8 : vector<128xf32> to vector<128x1xf32>
    %c0_i32 = arith.constant 0 : i32
    %10 = arith.cmpi eq, %arg2, %c0_i32 : i32
    %11 = arith.extui %10 : i1 to i32
    %c0_i32_5 = arith.constant 0 : i32
    %12 = arith.cmpi ne, %11, %c0_i32_5 : i32
    scf.if %12 {
      %c0_10 = arith.constant 0 : index
      %c0_11 = arith.constant 0 : index
      %19 = vector.load %arg8[%c0_10, %c0_11] : memref<128x128xf32, #tpu.memory_space<vmem>>, vector<128x128xf32>
      tpu.vector_store %arg8[%c0_10, %c0_11], %7 {strides = array<i32>} : memref<128x128xf32, #tpu.memory_space<vmem>>, vector<128x128xf32>,
      %c0_12 = arith.constant 0 : index
      %c0_13 = arith.constant 0 : index
      %20 = vector.load %arg9[%c0_12, %c0_13] : memref<128x1xf32, #tpu.memory_space<vmem>>, vector<128x1xf32>
      tpu.vector_store %arg9[%c0_12, %c0_13], %9 {strides = array<i32>} : memref<128x1xf32, #tpu.memory_space<vmem>>, vector<128x1xf32>,
    } else {
    }
    %c0_i32_6 = arith.constant 0 : i32
    %13 = arith.cmpi ne, %arg2, %c0_i32_6 : i32
    %14 = arith.extui %13 : i1 to i32
    %c0_i32_7 = arith.constant 0 : i32
    %15 = arith.cmpi ne, %14, %c0_i32_7 : i32
    scf.if %15 {
      %c0_10 = arith.constant 0 : index
      %c0_11 = arith.constant 0 : index
      %19 = vector.load %arg8[%c0_10, %c0_11] : memref<128x128xf32, #tpu.memory_space<vmem>>, vector<128x128xf32>
      %20 = arith.addf %19, %7 : vector<128x128xf32>
      %c0_12 = arith.constant 0 : index
      %c0_13 = arith.constant 0 : index
      %21 = vector.load %arg8[%c0_12, %c0_13] : memref<128x128xf32, #tpu.memory_space<vmem>>, vector<128x128xf32>
      tpu.vector_store %arg8[%c0_12, %c0_13], %20 {strides = array<i32>} : memref<128x128xf32, #tpu.memory_space<vmem>>, vector<128x128xf32>,
      %c0_14 = arith.constant 0 : index
      %c0_15 = arith.constant 0 : index
      %22 = vector.load %arg9[%c0_14, %c0_15] : memref<128x1xf32, #tpu.memory_space<vmem>>, vector<128x1xf32>
      %23 = arith.addf %22, %9 : vector<128x1xf32>
      %c0_16 = arith.constant 0 : index
      %c0_17 = arith.constant 0 : index
      %24 = vector.load %arg9[%c0_16, %c0_17] : memref<128x1xf32, #tpu.memory_space<vmem>>, vector<128x1xf32>
      tpu.vector_store %arg9[%c0_16, %c0_17], %23 {strides = array<i32>} : memref<128x1xf32, #tpu.memory_space<vmem>>, vector<128x1xf32>,
    } else {
    }
    %c0_i32_8 = arith.constant 0 : i32
    %16 = arith.cmpi eq, %arg2, %c0_i32_8 : i32
    %17 = arith.extui %16 : i1 to i32
    %c0_i32_9 = arith.constant 0 : i32
    %18 = arith.cmpi ne, %17, %c0_i32_9 : i32
    scf.if %18 {
      %c0_10 = arith.constant 0 : index
      %c0_11 = arith.constant 0 : index
      %19 = vector.load %arg8[%c0_10, %c0_11] : memref<128x128xf32, #tpu.memory_space<vmem>>, vector<128x128xf32>
      %c0_12 = arith.constant 0 : index
      %c0_13 = arith.constant 0 : index
      %20 = vector.load %arg5[%c0_12, %c0_13] : memref<128x128xf32, #tpu.memory_space<vmem>>, vector<128x128xf32>
      %cst_14 = arith.constant dense<0.000000e+00> : vector<128x128xf32>
      %21 = tpu.matmul %19, %20, %cst_14 {dimension_numbers = #tpu.dot_dimension_numbers<[1], [0], [0], [1], [0, 0, 1, 1], [], []>} : vector<128x128xf32>, vector<128x128xf32>, vector<128x128xf32> -> vector<128x128xf32>
      %c0_15 = arith.constant 0 : index
      %c0_16 = arith.constant 0 : index
      %22 = vector.load %arg9[%c0_15, %c0_16] : memref<128x1xf32, #tpu.memory_space<vmem>>, vector<128x1xf32>
      %c0_17 = arith.constant 0 : index
      %c0_18 = arith.constant 0 : index
      %23 = vector.load %arg6[%c0_17, %c0_18] : memref<1x128xf32, #tpu.memory_space<vmem>>, vector<1x128xf32>
      %24 = vector.broadcast %22 : vector<128x1xf32> to vector<128x128xf32>
      %25 = vector.broadcast %23 : vector<1x128xf32> to vector<128x128xf32>
      %26 = arith.mulf %24, %25 : vector<128x128xf32>
      %27 = arith.addf %21, %26 : vector<128x128xf32>
      %cst_19 = arith.constant 0.000000e+00 : f32
      %28 = vector.broadcast %cst_19 : f32 to vector<128x128xf32>
      %29 = arith.maximumf %27, %28 : vector<128x128xf32>
      %c0_20 = arith.constant 0 : index
      %c0_21 = arith.constant 0 : index
      %c0_22 = arith.constant 0 : index
      %30 = vector.load %arg7[%c0_20, %c0_21, %c0_22] : memref<1x128x128xf32, #tpu.memory_space<vmem>>, vector<1x128x128xf32>
      %31 = vector.shape_cast %30 : vector<1x128x128xf32> to vector<128x128xf32>
      %32 = vector.shape_cast %29 : vector<128x128xf32> to vector<1x128x128xf32>
      tpu.vector_store %arg7[%c0_20, %c0_21, %c0_22], %32 {strides = array<i32>} : memref<1x128x128xf32, #tpu.memory_space<vmem>>, vector<1x128x128xf32>,
    } else {
    }
    return
  }
  func.func @transform_0(%arg0: i32, %arg1: i32, %arg2: i32) -> (i32, i32, i32) {
    %c0_i32 = arith.constant 0 : i32
    %c0_i32_0 = arith.constant 0 : i32
    %c0_i32_1 = arith.constant 0 : i32
    return %arg0, %c0_i32, %c0_i32_0 : i32, i32, i32
  }
  func.func @transform_1(%arg0: i32, %arg1: i32, %arg2: i32) -> (i32, i32, i32) {
    %c0_i32 = arith.constant 0 : i32
    return %arg0, %arg1, %arg2 : i32, i32, i32
  }
  func.func @transform_2(%arg0: i32, %arg1: i32, %arg2: i32) -> (i32, i32) {
    %c0_i32 = arith.constant 0 : i32
    %c0_i32_0 = arith.constant 0 : i32
    %c0_i32_1 = arith.constant 0 : i32
    return %c0_i32, %c0_i32_0 : i32, i32
  }
  func.func @transform_3(%arg0: i32, %arg1: i32, %arg2: i32) -> (i32, i32) {
    %c0_i32 = arith.constant 0 : i32
    %c0_i32_0 = arith.constant 0 : i32
    %c0_i32_1 = arith.constant 0 : i32
    return %c0_i32, %c0_i32_0 : i32, i32
  }
  func.func @transform_4(%arg0: i32, %arg1: i32, %arg2: i32) -> (i32, i32, i32) {
    %c0_i32 = arith.constant 0 : i32
    %c0_i32_0 = arith.constant 0 : i32
    return %arg0, %arg1, %c0_i32 : i32, i32, i32
  }
}

</mosaic_0001>

<llo_original>
// kernel: gcn_layer.1
$region0: #{gcn_layer.1}
  #allocation0 [shape = 'u32[]', space=smem, size = 0x4, offset = 0x4, fixed_abs, tag = 'smem constant byte address 0x4 - core index']
  #allocation1 [shape = 'u32[72,128]{1,0:T(1,128)}', space=vmem, size = 0x9000, scoped, tag = 'internal scratch']
  #allocation2 [shape = 'f32[128,128]{1,0:T(8,128)}', space=vmem, size = 0x10000, scoped, tag = 'scratch operand']
  #allocation3 [shape = 'f32[128,1]{1,0:T(8,128)}', space=vmem, size = 0x10000, scoped, tag = 'scratch operand']
  %s0 = inlined_call_operand.vmem [shape: f32[2,128,128], index: 0, kind: input, shape index: {}]
  %s1 = inlined_call_operand.vmem [shape: f32[2,128,128], index: 1, kind: input, shape index: {}]
  %s2 = inlined_call_operand.vmem [shape: f32[128,128], index: 2, kind: input, shape index: {}]
  %s3 = inlined_call_operand.vmem [shape: f32[1,128], index: 3, kind: input, shape index: {}]
  %s4 = inlined_call_operand.vmem [shape: f32[2,128,128], index: 4, kind: output, shape index: {}]
  %s5 = sld [smem:[#allocation0]]
  $region61: #{gcn_layer.1} parent=0
    _
  %s7 = ssub.s32 1, %s5
  %s8 = scalar_select 0, %s7, %s5
  loop: start=0, step=1, limit=4
  $region2: #{gcn_layer.1} parent=0 // loop_pre_header
    _
  $region3: #{gcn_layer.1} parent=0 // loop_header
    %s10 = sphi 0, %s14
    %p11 = scmp.ge.s32.totalorder %s10, 4
    %s17 = sphi 0, %s36
    %s18 = sphi 0, %s32
    %s19 = sphi 0, %s28
    %s20 = sphi 0, %s17
    %s21 = sphi 0, %s18
    %s22 = sphi 0, %s19
    %s23 = sphi 0, %s20
    %s24 = sphi 0, %s21
    %s25 = sphi 0, %s22
    %s39 = sphi 0, %s41
    %s42 = sphi 0, %s39
    %s43 = sphi 0, %s42
    %s59 = sphi 0, %s43
    %s69 = sphi 0, %s71
    %s72 = sphi 0, %s69
    %s73 = sphi 0, %s72
    %s89 = sphi 0, %s73
    %s93 = sphi 0, %s93
    %s95 = sphi 0, %s93
    %s96 = sphi 0, %s95
    %s110 = sphi 0, %s96
    %s114 = sphi 0, %s114
    %s116 = sphi 0, %s114
    %s117 = sphi 0, %s116
    %s131 = sphi 0, %s117
    %s139 = sphi 0, %s141
    %s142 = sphi 0, %s139
    %s143 = sphi 0, %s142
    %s159 = sphi 0, %s143
  $region4: #{gcn_layer.1} parent=0 // loop_header_branch
    %13 = sbr.rel (%p11) target = $region8
  $region5: #{gcn_layer.1} parent=0 // loop_body
    %s15 = ssub.s32 %s10, 1
    %s16 = ssub.s32 %s10, 2
    %s26 = sadd.s32 1, %s19
    %p27 = scmp.ge.s32.totalorder %s26, 1
    %s28 = scalar_select %p27, 0, %s26
    %s29 = sadd.s32 1, %s18
    %s30 = scalar_select %p27, %s29, %s18
    %p31 = scmp.ge.s32.totalorder %s30, 1
    %s32 = scalar_select %p31, 0, %s30
    %s33 = sadd.s32 1, %s17
    %s34 = scalar_select %p31, %s33, %s17
    %p35 = scmp.ge.s32.totalorder %s34, 2
    %s36 = scalar_select %p35, 0, %s34
    %s37 = ssub.s32 %s17, %s36
    %p38 = scmp.eq.s32.totalorder %s37, 0
    %s40 = sadd.s32 %s39, 1
    %s41 = scalar_select %p38, %s39, %s40
    %p44 = pneg %p38
    %p45 = scmp.eq.s32.totalorder %s10, 1
    %p46 = por %p44, %p45
    %p47 = scmp.ne.s32.totalorder %s39, %s42
    %p48 = scmp.eq.s32.totalorder %s10, 0
    %p49 = por %p47, %p48
    %p50 = scmp.ne.s32.totalorder %s39, %s42
    %p51 = scmp.eq.s32.totalorder %s15, 1
    %p52 = por %p50, %p51
    %p53 = scmp.ne.s32.totalorder %s42, %s43
    %p54 = scmp.eq.s32.totalorder %s15, 0
    %p55 = por %p53, %p54
    %p56 = scmp.ne.s32.totalorder %s42, %s43
    %p57 = scmp.eq.s32.totalorder %s16, 1
    %p58 = por %p56, %p57
    %p60 = scmp.ne.s32.totalorder %s43, %s59
    %p61 = scmp.eq.s32.totalorder %s16, 0
    %p62 = por %p60, %p61
    %s63 = ssub.s32 %s17, %s36
    %s64 = ssub.s32 %s18, %s32
    %s65 = sor.u32 %s63, %s64
    %s66 = ssub.s32 %s19, %s28
    %s67 = sor.u32 %s65, %s66
    %p68 = scmp.eq.s32.totalorder %s67, 0
    %s70 = sadd.s32 %s69, 1
    %s71 = scalar_select %p68, %s69, %s70
    %p74 = pneg %p68
    %p75 = scmp.eq.s32.totalorder %s10, 1
    %p76 = por %p74, %p75
    %p77 = scmp.ne.s32.totalorder %s69, %s72
    %p78 = scmp.eq.s32.totalorder %s10, 0
    %p79 = por %p77, %p78
    %p80 = scmp.ne.s32.totalorder %s69, %s72
    %p81 = scmp.eq.s32.totalorder %s15, 1
    %p82 = por %p80, %p81
    %p83 = scmp.ne.s32.totalorder %s72, %s73
    %p84 = scmp.eq.s32.totalorder %s15, 0
    %p85 = por %p83, %p84
    %p86 = scmp.ne.s32.totalorder %s72, %s73
    %p87 = scmp.eq.s32.totalorder %s16, 1
    %p88 = por %p86, %p87
    %p90 = scmp.ne.s32.totalorder %s73, %s89
    %p91 = scmp.eq.s32.totalorder %s16, 0
    %p92 = por %p90, %p91
    %s94 = sadd.s32 %s93, 1
    %p97 = scmp.eq.s32.totalorder %s10, 1
    %p98 = scmp.ne.s32.totalorder %s93, %s95
    %p99 = scmp.eq.s32.totalorder %s10, 0
    %p100 = por %p98, %p99
    %p101 = scmp.ne.s32.totalorder %s93, %s95
    %p102 = scmp.eq.s32.totalorder %s15, 1
    %p103 = por %p101, %p102
    %p104 = scmp.ne.s32.totalorder %s95, %s96
    %p105 = scmp.eq.s32.totalorder %s15, 0
    %p106 = por %p104, %p105
    %p107 = scmp.ne.s32.totalorder %s95, %s96
    %p108 = scmp.eq.s32.totalorder %s16, 1
    %p109 = por %p107, %p108
    %p111 = scmp.ne.s32.totalorder %s96, %s110
    %p112 = scmp.eq.s32.totalorder %s16, 0
    %p113 = por %p111, %p112
    %s115 = sadd.s32 %s114, 1
    %p118 = scmp.eq.s32.totalorder %s10, 1
    %p119 = scmp.ne.s32.totalorder %s114, %s116
    %p120 = scmp.eq.s32.totalorder %s10, 0
    %p121 = por %p119, %p120
    %p122 = scmp.ne.s32.totalorder %s114, %s116
    %p123 = scmp.eq.s32.totalorder %s15, 1
    %p124 = por %p122, %p123
    %p125 = scmp.ne.s32.totalorder %s116, %s117
    %p126 = scmp.eq.s32.totalorder %s15, 0
    %p127 = por %p125, %p126
    %p128 = scmp.ne.s32.totalorder %s116, %s117
    %p129 = scmp.eq.s32.totalorder %s16, 1
    %p130 = por %p128, %p129
    %p132 = scmp.ne.s32.totalorder %s117, %s131
    %p133 = scmp.eq.s32.totalorder %s16, 0
    %p134 = por %p132, %p133
    %s135 = ssub.s32 %s17, %s36
    %s136 = ssub.s32 %s18, %s32
    %s137 = sor.u32 %s135, %s136
    %p138 = scmp.eq.s32.totalorder %s137, 0
    %s140 = sadd.s32 %s139, 1
    %s141 = scalar_select %p138, %s139, %s140
    %p144 = pneg %p138
    %p145 = scmp.eq.s32.totalorder %s10, 1
    %p146 = por %p144, %p145
    %p147 = scmp.ne.s32.totalorder %s139, %s142
    %p148 = scmp.eq.s32.totalorder %s10, 0
    %p149 = por %p147, %p148
    %p150 = scmp.ne.s32.totalorder %s139, %s142
    %p151 = scmp.eq.s32.totalorder %s15, 1
    %p152 = por %p150, %p151
    %p153 = scmp.ne.s32.totalorder %s142, %s143
    %p154 = scmp.eq.s32.totalorder %s15, 0
    %p155 = por %p153, %p154
    %p156 = scmp.ne.s32.totalorder %s142, %s143
    %p157 = scmp.eq.s32.totalorder %s16, 1
    %p158 = por %p156, %p157
    %p160 = scmp.ne.s32.totalorder %s143, %s159
    %p161 = scmp.eq.s32.totalorder %s16, 0
    %p162 = por %p160, %p161
    %p163 = scmp.le.s32.totalorder 1, %s10
    %p164 = scmp.lt.s32.totalorder %s10, 3
    %p165 = pnand %p163, %p164
    %p166 = pneg %p165
    // Predicated region
    $region9: #{gcn_layer.1} parent=5 // pred_check
      _
    $region10: #{gcn_layer.1} parent=5 // pred_check_branch
      %168 = sbr.rel (%p165) target = $region12
    $region11: #{gcn_layer.1} parent=5 // pred_region
      %s169 = ssub.s32 %s10, 1
      // Predicated region
      $region13: #{gcn_layer.1} parent=11 // pred_check
        %p170 = pneg %p106
      $region14: #{gcn_layer.1} parent=11 // pred_check_branch
        %172 = sbr.rel (%p170) target = $region16
      $region15: #{gcn_layer.1} parent=11 // pred_region
        _
      $region16: #{gcn_layer.1} parent=11 // pred_fallthru
        _
      // Predicated region
      $region17: #{gcn_layer.1} parent=11 // pred_check
        %p173 = pneg %p127
      $region18: #{gcn_layer.1} parent=11 // pred_check_branch
        %175 = sbr.rel (%p173) target = $region20
      $region19: #{gcn_layer.1} parent=11 // pred_region
        _
      $region20: #{gcn_layer.1} parent=11 // pred_fallthru
        _
    $region12: #{gcn_layer.1} parent=5 // pred_fallthru
      _
    %p176 = scmp.lt.s32.totalorder %s10, 2
    // Predicated region
    $region21: #{gcn_layer.1} parent=5 // pred_check
      %p177 = pneg %p176
    $region22: #{gcn_layer.1} parent=5 // pred_check_branch
      %179 = sbr.rel (%p177) target = $region24
    $region23: #{gcn_layer.1} parent=5 // pred_region
      // Predicated region
      $region25: #{gcn_layer.1} parent=23 // pred_check
        %p180 = pneg %p49
      $region26: #{gcn_layer.1} parent=23 // pred_check_branch
        %182 = sbr.rel (%p180) target = $region28
      $region27: #{gcn_layer.1} parent=23 // pred_region
        %p183 = scmp.lt.s32.totalorder %s17, 1
        %s184 = scalar_select %p183, %s17, 1
        %s185 = smul.addr %s184, 16
        %s186 = smul.addr %s185, 8
        %s187 = scalar_lea.vmem %s0, %s186
      $region28: #{gcn_layer.1} parent=23 // pred_fallthru
        _
      // Predicated region
      $region29: #{gcn_layer.1} parent=23 // pred_check
        %p188 = pneg %p79
      $region30: #{gcn_layer.1} parent=23 // pred_check_branch
        %190 = sbr.rel (%p188) target = $region32
      $region31: #{gcn_layer.1} parent=23 // pred_region
        %s191 = smul.u32 16, %s18
        %p192 = scmp.lt.s32.totalorder %s17, 1
        %s193 = scalar_select %p192, %s17, 1
        %p194 = scmp.lt.s32.totalorder %s191, 15
        %s195 = scalar_select %p194, %s191, 15
        %p196 = scmp.lt.s32.totalorder %s19, 0
        %s197 = scalar_select %p196, %s19, 0
        %s198 = sadd.s32 %s197, %s195
        %s199 = smul.addr %s193, 16
        %s200 = sadd.s32 %s198, %s199
        %s201 = smul.addr %s200, 8
        %s202 = scalar_lea.vmem %s1, %s201
        %s203 = smul.u32 16, %s18
      $region32: #{gcn_layer.1} parent=23 // pred_fallthru
        _
    $region24: #{gcn_layer.1} parent=5 // pred_fallthru
      _
    %p204 = scmp.le.s32.totalorder 1, %s10
    %p205 = scmp.lt.s32.totalorder %s10, 3
    %p206 = pnand %p204, %p205
    %p207 = pneg %p206
    // Predicated region
    $region33: #{gcn_layer.1} parent=5 // pred_check
      _
    $region34: #{gcn_layer.1} parent=5 // pred_check_branch
      %209 = sbr.rel (%p206) target = $region36
    $region35: #{gcn_layer.1} parent=5 // pred_region
      %s210 = ssub.s32 %s10, 1
      %p211 = scmp.lt.s32.totalorder %s20, 1
      %s212 = scalar_select %p211, %s20, 1
      %s213 = smul.addr %s212, 16
      %s214 = smul.addr %s213, 8
      %s215 = scalar_lea.vmem %s0, %s214
      %p216 = pneg %p55
      %p217 = pneg %p52
      %s218 = smul.u32 16, %s21
      %p219 = scmp.lt.s32.totalorder %s20, 1
      %s220 = scalar_select %p219, %s20, 1
      %p221 = scmp.lt.s32.totalorder %s218, 15
      %s222 = scalar_select %p221, %s218, 15
      %p223 = scmp.lt.s32.totalorder %s22, 0
      %s224 = scalar_select %p223, %s22, 0
      %s225 = sadd.s32 %s224, %s222
      %s226 = smul.addr %s220, 16
      %s227 = sadd.s32 %s225, %s226
      %s228 = smul.addr %s227, 8
      %s229 = scalar_lea.vmem %s1, %s228
      %p230 = pneg %p85
      %p231 = pneg %p82
      %p232 = pneg %p106
      %p233 = pneg %p103
      %p234 = pneg %p127
      %p235 = pneg %p124
      %p236 = pneg %p155
      %p237 = pneg %p152
      %s238 = smul.u32 16, %s21
      %p239 = scmp.lt.s32.totalorder %s20, 1
      %s240 = scalar_select %p239, %s20, 1
      %p241 = scmp.lt.s32.totalorder %s238, 15
      %s242 = scalar_select %p241, %s238, 15
      %s243 = smul.addr %s240, 16
      %s244 = sadd.s32 %s242, %s243
      %s245 = smul.addr %s244, 8
      %s246 = scalar_lea.vmem %s4, %s245
      %p247 = scmp.lt.s32.totalorder %s20, 1
      %s248 = scalar_select %p247, %s20, 1
      %s249 = smul.addr %s248, 16
      %s250 = smul.addr %s249, 8
      %s251 = scalar_lea.vmem %s0, %s250
      %s252 = smul.u32 16, %s21
      %p253 = scmp.lt.s32.totalorder %s20, 1
      %s254 = scalar_select %p253, %s20, 1
      %p255 = scmp.lt.s32.totalorder %s252, 15
      %s256 = scalar_select %p255, %s252, 15
      %p257 = scmp.lt.s32.totalorder %s22, 0
      %s258 = scalar_select %p257, %s22, 0
      %s259 = sadd.s32 %s258, %s256
      %s260 = smul.addr %s254, 16
      %s261 = sadd.s32 %s259, %s260
      %s262 = smul.addr %s261, 8
      %s263 = scalar_lea.vmem %s1, %s262
      %s264 = smul.u32 16, %s21
      %s265 = smul.u32 16, %s21
      %p266 = scmp.lt.s32.totalorder %s20, 1
      %s267 = scalar_select %p266, %s20, 1
      %p268 = scmp.lt.s32.totalorder %s265, 15
      %s269 = scalar_select %p268, %s265, 15
      %s270 = smul.addr %s267, 16
      %s271 = sadd.s32 %s269, %s270
      %s272 = smul.addr %s271, 8
      %s273 = scalar_lea.vmem %s4, %s272
      %s274 = smul.u32 16, %s21
      %s275 = smul.u32 %s22, 128
      %s276 = scalar_lea.vmem %s251, %s275
      %v277 = vld [vmem:[%s276] sm:$0xff]
      %v278 = vld [vmem:[%s276 + $0x8] sm:$0xff]
      %v279 = vld [vmem:[%s276 + $0x10] sm:$0xff]
      %v280 = vld [vmem:[%s276 + $0x18] sm:$0xff]
      %v281 = vld [vmem:[%s276 + $0x20] sm:$0xff]
      %v282 = vld [vmem:[%s276 + $0x28] sm:$0xff]
      %v283 = vld [vmem:[%s276 + $0x30] sm:$0xff]
      %v284 = vld [vmem:[%s276 + $0x38] sm:$0xff]
      %v285 = vld [vmem:[%s276 + $0x40] sm:$0xff]
      %v286 = vld [vmem:[%s276 + $0x48] sm:$0xff]
      %v287 = vld [vmem:[%s276 + $0x50] sm:$0xff]
      %v288 = vld [vmem:[%s276 + $0x58] sm:$0xff]
      %v289 = vld [vmem:[%s276 + $0x60] sm:$0xff]
      %v290 = vld [vmem:[%s276 + $0x68] sm:$0xff]
      %v291 = vld [vmem:[%s276 + $0x70] sm:$0xff]
      %v292 = vld [vmem:[%s276 + $0x78] sm:$0xff]
      %v293 = vld [vmem:[%s263] sm:$0xff]
      %v294 = vld [vmem:[%s263 + $0x8] sm:$0xff]
      %v295 = vld [vmem:[%s263 + $0x10] sm:$0xff]
      %v296 = vld [vmem:[%s263 + $0x18] sm:$0xff]
      %v297 = vld [vmem:[%s263 + $0x20] sm:$0xff]
      %v298 = vld [vmem:[%s263 + $0x28] sm:$0xff]
      %v299 = vld [vmem:[%s263 + $0x30] sm:$0xff]
      %v300 = vld [vmem:[%s263 + $0x38] sm:$0xff]
      %v301 = vld [vmem:[%s263 + $0x40] sm:$0xff]
      %v302 = vld [vmem:[%s263 + $0x48] sm:$0xff]
      %v303 = vld [vmem:[%s263 + $0x50] sm:$0xff]
      %v304 = vld [vmem:[%s263 + $0x58] sm:$0xff]
      %v305 = vld [vmem:[%s263 + $0x60] sm:$0xff]
      %v306 = vld [vmem:[%s263 + $0x68] sm:$0xff]
      %v307 = vld [vmem:[%s263 + $0x70] sm:$0xff]
      %v308 = vld [vmem:[%s263 + $0x78] sm:$0xff]
      %309 = vmatpush.msra.mxu0 %v292
      %310 = vmatpush.msra.mxu0 %v291
      %311 = vmatpush.msra.mxu0 %v290
      %312 = vmatpush.msra.mxu0 %v289
      %313 = vmatpush.msra.mxu0 %v288
      %314 = vmatpush.msra.mxu0 %v287
      %315 = vmatpush.msra.mxu0 %v286
      %316 = vmatpush.msra.mxu0 %v285
      %317 = vmatpush.msra.mxu0 %v284
      %318 = vmatpush.msra.mxu0 %v283
      %319 = vmatpush.msra.mxu0 %v282
      %320 = vmatpush.msra.mxu0 %v281
      %321 = vmatpush.msra.mxu0 %v280
      %322 = vmatpush.msra.mxu0 %v279
      %323 = vmatpush.msra.mxu0 %v278
      %324 = vmatpush.msra.mxu0 %v277
      %325 = vmatmul.f32.gmra.mxu0 %v293
      %v326 = vpop.f32.mrf.mxu0
      %v327 = vadd.f32 0.0, %v326
      %328 = vmatmul.f32.gmra.mxu0 %v294
      %v329 = vpop.f32.mrf.mxu0
      %v330 = vadd.f32 0.0, %v329
      %331 = vmatmul.f32.gmra.mxu0 %v295
      %v332 = vpop.f32.mrf.mxu0
      %v333 = vadd.f32 0.0, %v332
      %334 = vmatmul.f32.gmra.mxu0 %v296
      %v335 = vpop.f32.mrf.mxu0
      %v336 = vadd.f32 0.0, %v335
      %337 = vmatmul.f32.gmra.mxu0 %v297
      %v338 = vpop.f32.mrf.mxu0
      %v339 = vadd.f32 0.0, %v338
      %340 = vmatmul.f32.gmra.mxu0 %v298
      %v341 = vpop.f32.mrf.mxu0
      %v342 = vadd.f32 0.0, %v341
      %343 = vmatmul.f32.gmra.mxu0 %v299
      %v344 = vpop.f32.mrf.mxu0
      %v345 = vadd.f32 0.0, %v344
      %346 = vmatmul.f32.gmra.mxu0 %v300
      %v347 = vpop.f32.mrf.mxu0
      %v348 = vadd.f32 0.0, %v347
      %349 = vmatmul.f32.gmra.mxu0 %v301
      %v350 = vpop.f32.mrf.mxu0
      %v351 = vadd.f32 0.0, %v350
      %352 = vmatmul.f32.gmra.mxu0 %v302
      %v353 = vpop.f32.mrf.mxu0
      %v354 = vadd.f32 0.0, %v353
      %355 = vmatmul.f32.gmra.mxu0 %v303
      %v356 = vpop.f32.mrf.mxu0
      %v357 = vadd.f32 0.0, %v356
      %358 = vmatmul.f32.gmra.mxu0 %v304
      %v359 = vpop.f32.mrf.mxu0
      %v360 = vadd.f32 0.0, %v359
      %361 = vmatmul.f32.gmra.mxu0 %v305
      %v362 = vpop.f32.mrf.mxu0
      %v363 = vadd.f32 0.0, %v362
      %364 = vmatmul.f32.gmra.mxu0 %v306
      %v365 = vpop.f32.mrf.mxu0
      %v366 = vadd.f32 0.0, %v365
      %367 = vmatmul.f32.gmra.mxu0 %v307
      %v368 = vpop.f32.mrf.mxu0
      %v369 = vadd.f32 0.0, %v368
      %370 = vmatmul.f32.gmra.mxu0 %v308
      %v371 = vpop.f32.mrf.mxu0
      %v372 = vadd.f32 0.0, %v371
      %373 = vdwg.mxu0
      %374 = vadd.xlane.f32.xlu0 %v293
      %v375 = vpop.xlane.xlu0 %374
      %376 = vadd.xlane.f32.xlu0 %v294
      %v377 = vpop.xlane.xlu0 %376
      %378 = vadd.xlane.f32.xlu0 %v295
      %v379 = vpop.xlane.xlu0 %378
      %380 = vadd.xlane.f32.xlu0 %v296
      %v381 = vpop.xlane.xlu0 %380
      %382 = vadd.xlane.f32.xlu0 %v297
      %v383 = vpop.xlane.xlu0 %382
      %384 = vadd.xlane.f32.xlu0 %v298
      %v385 = vpop.xlane.xlu0 %384
      %386 = vadd.xlane.f32.xlu0 %v299
      %v387 = vpop.xlane.xlu0 %386
      %388 = vadd.xlane.f32.xlu0 %v300
      %v389 = vpop.xlane.xlu0 %388
      %390 = vadd.xlane.f32.xlu0 %v301
      %v391 = vpop.xlane.xlu0 %390
      %392 = vadd.xlane.f32.xlu0 %v302
      %v393 = vpop.xlane.xlu0 %392
      %394 = vadd.xlane.f32.xlu0 %v303
      %v395 = vpop.xlane.xlu0 %394
      %396 = vadd.xlane.f32.xlu0 %v304
      %v397 = vpop.xlane.xlu0 %396
      %398 = vadd.xlane.f32.xlu0 %v305
      %v399 = vpop.xlane.xlu0 %398
      %400 = vadd.xlane.f32.xlu0 %v306
      %v401 = vpop.xlane.xlu0 %400
      %402 = vadd.xlane.f32.xlu0 %v307
      %v403 = vpop.xlane.xlu0 %402
      %404 = vadd.xlane.f32.xlu0 %v308
      %v405 = vpop.xlane.xlu0 %404
      %p406 = scmp.eq.s32.totalorder %s22, 0
      // Predicated region
      $region37: #{gcn_layer.1} parent=35 // pred_check
        %p407 = pneg %p406
      $region38: #{gcn_layer.1} parent=35 // pred_check_branch
        %409 = sbr.rel (%p407) target = $region40
      $region39: #{gcn_layer.1} parent=35 // pred_region
        %410 = vst [vmem:[#allocation2] sm:$0xff] %v327
        %411 = vst [vmem:[#allocation2 + $0x8] sm:$0xff] %v330
        %412 = vst [vmem:[#allocation2 + $0x10] sm:$0xff] %v333
        %413 = vst [vmem:[#allocation2 + $0x18] sm:$0xff] %v336
        %414 = vst [vmem:[#allocation2 + $0x20] sm:$0xff] %v339
        %415 = vst [vmem:[#allocation2 + $0x28] sm:$0xff] %v342
        %416 = vst [vmem:[#allocation2 + $0x30] sm:$0xff] %v345
        %417 = vst [vmem:[#allocation2 + $0x38] sm:$0xff] %v348
        %418 = vst [vmem:[#allocation2 + $0x40] sm:$0xff] %v351
        %419 = vst [vmem:[#allocation2 + $0x48] sm:$0xff] %v354
        %420 = vst [vmem:[#allocation2 + $0x50] sm:$0xff] %v357
        %421 = vst [vmem:[#allocation2 + $0x58] sm:$0xff] %v360
        %422 = vst [vmem:[#allocation2 + $0x60] sm:$0xff] %v363
        %423 = vst [vmem:[#allocation2 + $0x68] sm:$0xff] %v366
        %424 = vst [vmem:[#allocation2 + $0x70] sm:$0xff] %v369
        %425 = vst [vmem:[#allocation2 + $0x78] sm:$0xff] %v372
        %vm426 = vcmask 7168
        %427 = vst.msk [vmem:[#allocation3] sm:$0xff] %vm426, %v375
        %428 = vst.msk [vmem:[#allocation3 + $0x8] sm:$0xff] %vm426, %v377
        %429 = vst.msk [vmem:[#allocation3 + $0x10] sm:$0xff] %vm426, %v379
        %430 = vst.msk [vmem:[#allocation3 + $0x18] sm:$0xff] %vm426, %v381
        %431 = vst.msk [vmem:[#allocation3 + $0x20] sm:$0xff] %vm426, %v383
        %432 = vst.msk [vmem:[#allocation3 + $0x28] sm:$0xff] %vm426, %v385
        %433 = vst.msk [vmem:[#allocation3 + $0x30] sm:$0xff] %vm426, %v387
        %434 = vst.msk [vmem:[#allocation3 + $0x38] sm:$0xff] %vm426, %v389
        %435 = vst.msk [vmem:[#allocation3 + $0x40] sm:$0xff] %vm426, %v391
        %436 = vst.msk [vmem:[#allocation3 + $0x48] sm:$0xff] %vm426, %v393
        %437 = vst.msk [vmem:[#allocation3 + $0x50] sm:$0xff] %vm426, %v395
        %438 = vst.msk [vmem:[#allocation3 + $0x58] sm:$0xff] %vm426, %v397
        %439 = vst.msk [vmem:[#allocation3 + $0x60] sm:$0xff] %vm426, %v399
        %440 = vst.msk [vmem:[#allocation3 + $0x68] sm:$0xff] %vm426, %v401
        %441 = vst.msk [vmem:[#allocation3 + $0x70] sm:$0xff] %vm426, %v403
        %442 = vst.msk [vmem:[#allocation3 + $0x78] sm:$0xff] %vm426, %v405
      $region40: #{gcn_layer.1} parent=35 // pred_fallthru
        _
      %p443 = scmp.ne.s32.totalorder %s22, 0
      // Predicated region
      $region41: #{gcn_layer.1} parent=35 // pred_check
        %p444 = pneg %p443
      $region42: #{gcn_layer.1} parent=35 // pred_check_branch
        %446 = sbr.rel (%p444) target = $region44
      $region43: #{gcn_layer.1} parent=35 // pred_region
        %v447 = vld [vmem:[#allocation2] sm:$0xff]
        %v448 = vld [vmem:[#allocation2 + $0x8] sm:$0xff]
        %v449 = vld [vmem:[#allocation2 + $0x10] sm:$0xff]
        %v450 = vld [vmem:[#allocation2 + $0x18] sm:$0xff]
        %v451 = vld [vmem:[#allocation2 + $0x20] sm:$0xff]
        %v452 = vld [vmem:[#allocation2 + $0x28] sm:$0xff]
        %v453 = vld [vmem:[#allocation2 + $0x30] sm:$0xff]
        %v454 = vld [vmem:[#allocation2 + $0x38] sm:$0xff]
        %v455 = vld [vmem:[#allocation2 + $0x40] sm:$0xff]
        %v456 = vld [vmem:[#allocation2 + $0x48] sm:$0xff]
        %v457 = vld [vmem:[#allocation2 + $0x50] sm:$0xff]
        %v458 = vld [vmem:[#allocation2 + $0x58] sm:$0xff]
        %v459 = vld [vmem:[#allocation2 + $0x60] sm:$0xff]
        %v460 = vld [vmem:[#allocation2 + $0x68] sm:$0xff]
        %v461 = vld [vmem:[#allocation2 + $0x70] sm:$0xff]
        %v462 = vld [vmem:[#allocation2 + $0x78] sm:$0xff]
        %v463 = vadd.f32 %v447, %v327
        %v464 = vadd.f32 %v448, %v330
        %v465 = vadd.f32 %v449, %v333
        %v466 = vadd.f32 %v450, %v336
        %v467 = vadd.f32 %v451, %v339
        %v468 = vadd.f32 %v452, %v342
        %v469 = vadd.f32 %v453, %v345
        %v470 = vadd.f32 %v454, %v348
        %v471 = vadd.f32 %v455, %v351
        %v472 = vadd.f32 %v456, %v354
        %v473 = vadd.f32 %v457, %v357
        %v474 = vadd.f32 %v458, %v360
        %v475 = vadd.f32 %v459, %v363
        %v476 = vadd.f32 %v460, %v366
        %v477 = vadd.f32 %v461, %v369
        %v478 = vadd.f32 %v462, %v372
        %479 = vst [vmem:[#allocation2] sm:$0xff] %v463
        %480 = vst [vmem:[#allocation2 + $0x8] sm:$0xff] %v464
        %481 = vst [vmem:[#allocation2 + $0x10] sm:$0xff] %v465
        %482 = vst [vmem:[#allocation2 + $0x18] sm:$0xff] %v466
        %483 = vst [vmem:[#allocation2 + $0x20] sm:$0xff] %v467
        %484 = vst [vmem:[#allocation2 + $0x28] sm:$0xff] %v468
        %485 = vst [vmem:[#allocation2 + $0x30] sm:$0xff] %v469
        %486 = vst [vmem:[#allocation2 + $0x38] sm:$0xff] %v470
        %487 = vst [vmem:[#allocation2 + $0x40] sm:$0xff] %v471
        %488 = vst [vmem:[#allocation2 + $0x48] sm:$0xff] %v472
        %489 = vst [vmem:[#allocation2 + $0x50] sm:$0xff] %v473
        %490 = vst [vmem:[#allocation2 + $0x58] sm:$0xff] %v474
        %491 = vst [vmem:[#allocation2 + $0x60] sm:$0xff] %v475
        %492 = vst [vmem:[#allocation2 + $0x68] sm:$0xff] %v476
        %493 = vst [vmem:[#allocation2 + $0x70] sm:$0xff] %v477
        %494 = vst [vmem:[#allocation2 + $0x78] sm:$0xff] %v478
        %v495 = vld [vmem:[#allocation3] sm:$0xff]
        %v496 = vld [vmem:[#allocation3 + $0x8] sm:$0xff]
        %v497 = vld [vmem:[#allocation3 + $0x10] sm:$0xff]
        %v498 = vld [vmem:[#allocation3 + $0x18] sm:$0xff]
        %v499 = vld [vmem:[#allocation3 + $0x20] sm:$0xff]
        %v500 = vld [vmem:[#allocation3 + $0x28] sm:$0xff]
        %v501 = vld [vmem:[#allocation3 + $0x30] sm:$0xff]
        %v502 = vld [vmem:[#allocation3 + $0x38] sm:$0xff]
        %v503 = vld [vmem:[#allocation3 + $0x40] sm:$0xff]
        %v504 = vld [vmem:[#allocation3 + $0x48] sm:$0xff]
        %v505 = vld [vmem:[#allocation3 + $0x50] sm:$0xff]
        %v506 = vld [vmem:[#allocation3 + $0x58] sm:$0xff]
        %v507 = vld [vmem:[#allocation3 + $0x60] sm:$0xff]
        %v508 = vld [vmem:[#allocation3 + $0x68] sm:$0xff]
        %v509 = vld [vmem:[#allocation3 + $0x70] sm:$0xff]
        %v510 = vld [vmem:[#allocation3 + $0x78] sm:$0xff]
        %v511 = vadd.f32 %v495, %v375
        %v512 = vadd.f32 %v496, %v377
        %v513 = vadd.f32 %v497, %v379
        %v514 = vadd.f32 %v498, %v381
        %v515 = vadd.f32 %v499, %v383
        %v516 = vadd.f32 %v500, %v385
        %v517 = vadd.f32 %v501, %v387
        %v518 = vadd.f32 %v502, %v389
        %v519 = vadd.f32 %v503, %v391
        %v520 = vadd.f32 %v504, %v393
        %v521 = vadd.f32 %v505, %v395
        %v522 = vadd.f32 %v506, %v397
        %v523 = vadd.f32 %v507, %v399
        %v524 = vadd.f32 %v508, %v401
        %v525 = vadd.f32 %v509, %v403
        %v526 = vadd.f32 %v510, %v405
        %vm527 = vcmask 7168
        %528 = vst.msk [vmem:[#allocation3] sm:$0xff] %vm527, %v511
        %529 = vst.msk [vmem:[#allocation3 + $0x8] sm:$0xff] %vm527, %v512
        %530 = vst.msk [vmem:[#allocation3 + $0x10] sm:$0xff] %vm527, %v513
        %531 = vst.msk [vmem:[#allocation3 + $0x18] sm:$0xff] %vm527, %v514
        %532 = vst.msk [vmem:[#allocation3 + $0x20] sm:$0xff] %vm527, %v515
        %533 = vst.msk [vmem:[#allocation3 + $0x28] sm:$0xff] %vm527, %v516
        %534 = vst.msk [vmem:[#allocation3 + $0x30] sm:$0xff] %vm527, %v517
        %535 = vst.msk [vmem:[#allocation3 + $0x38] sm:$0xff] %vm527, %v518
        %536 = vst.msk [vmem:[#allocation3 + $0x40] sm:$0xff] %vm527, %v519
        %537 = vst.msk [vmem:[#allocation3 + $0x48] sm:$0xff] %vm527, %v520
        %538 = vst.msk [vmem:[#allocation3 + $0x50] sm:$0xff] %vm527, %v521
        %539 = vst.msk [vmem:[#allocation3 + $0x58] sm:$0xff] %vm527, %v522
        %540 = vst.msk [vmem:[#allocation3 + $0x60] sm:$0xff] %vm527, %v523
        %541 = vst.msk [vmem:[#allocation3 + $0x68] sm:$0xff] %vm527, %v524
        %542 = vst.msk [vmem:[#allocation3 + $0x70] sm:$0xff] %vm527, %v525
        %543 = vst.msk [vmem:[#allocation3 + $0x78] sm:$0xff] %vm527, %v526
      $region44: #{gcn_layer.1} parent=35 // pred_fallthru
        _
      // Predicated region
      $region45: #{gcn_layer.1} parent=35 // pred_check
        %p544 = pneg %p406
      $region46: #{gcn_layer.1} parent=35 // pred_check_branch
        %546 = sbr.rel (%p544) target = $region48
      $region47: #{gcn_layer.1} parent=35 // pred_region
        %v547 = vld [vmem:[#allocation2] sm:$0xff]
        %v548 = vld [vmem:[#allocation2 + $0x8] sm:$0xff]
        %v549 = vld [vmem:[#allocation2 + $0x10] sm:$0xff]
        %v550 = vld [vmem:[#allocation2 + $0x18] sm:$0xff]
        %v551 = vld [vmem:[#allocation2 + $0x20] sm:$0xff]
        %v552 = vld [vmem:[#allocation2 + $0x28] sm:$0xff]
        %v553 = vld [vmem:[#allocation2 + $0x30] sm:$0xff]
        %v554 = vld [vmem:[#allocation2 + $0x38] sm:$0xff]
        %v555 = vld [vmem:[#allocation2 + $0x40] sm:$0xff]
        %v556 = vld [vmem:[#allocation2 + $0x48] sm:$0xff]
        %v557 = vld [vmem:[#allocation2 + $0x50] sm:$0xff]
        %v558 = vld [vmem:[#allocation2 + $0x58] sm:$0xff]
        %v559 = vld [vmem:[#allocation2 + $0x60] sm:$0xff]
        %v560 = vld [vmem:[#allocation2 + $0x68] sm:$0xff]
        %v561 = vld [vmem:[#allocation2 + $0x70] sm:$0xff]
        %v562 = vld [vmem:[#allocation2 + $0x78] sm:$0xff]
        %v563 = vld [vmem:[%s2] sm:$0xff]
        %v564 = vld [vmem:[%s2 + $0x8] sm:$0xff]
        %v565 = vld [vmem:[%s2 + $0x10] sm:$0xff]
        %v566 = vld [vmem:[%s2 + $0x18] sm:$0xff]
        %v567 = vld [vmem:[%s2 + $0x20] sm:$0xff]
        %v568 = vld [vmem:[%s2 + $0x28] sm:$0xff]
        %v569 = vld [vmem:[%s2 + $0x30] sm:$0xff]
        %v570 = vld [vmem:[%s2 + $0x38] sm:$0xff]
        %v571 = vld [vmem:[%s2 + $0x40] sm:$0xff]
        %v572 = vld [vmem:[%s2 + $0x48] sm:$0xff]
        %v573 = vld [vmem:[%s2 + $0x50] sm:$0xff]
        %v574 = vld [vmem:[%s2 + $0x58] sm:$0xff]
        %v575 = vld [vmem:[%s2 + $0x60] sm:$0xff]
        %v576 = vld [vmem:[%s2 + $0x68] sm:$0xff]
        %v577 = vld [vmem:[%s2 + $0x70] sm:$0xff]
        %v578 = vld [vmem:[%s2 + $0x78] sm:$0xff]
        %v579 = vld [vmem:[#allocation3] sm:$0xff]
        %v580 = vld [vmem:[#allocation3 + $0x8] sm:$0xff]
        %v581 = vld [vmem:[#allocation3 + $0x10] sm:$0xff]
        %v582 = vld [vmem:[#allocation3 + $0x18] sm:$0xff]
        %v583 = vld [vmem:[#allocation3 + $0x20] sm:$0xff]
        %v584 = vld [vmem:[#allocation3 + $0x28] sm:$0xff]
        %v585 = vld [vmem:[#allocation3 + $0x30] sm:$0xff]
        %v586 = vld [vmem:[#allocation3 + $0x38] sm:$0xff]
        %v587 = vld [vmem:[#allocation3 + $0x40] sm:$0xff]
        %v588 = vld [vmem:[#allocation3 + $0x48] sm:$0xff]
        %v589 = vld [vmem:[#allocation3 + $0x50] sm:$0xff]
        %v590 = vld [vmem:[#allocation3 + $0x58] sm:$0xff]
        %v591 = vld [vmem:[#allocation3 + $0x60] sm:$0xff]
        %v592 = vld [vmem:[#allocation3 + $0x68] sm:$0xff]
        %v593 = vld [vmem:[#allocation3 + $0x70] sm:$0xff]
        %v594 = vld [vmem:[#allocation3 + $0x78] sm:$0xff]
        %v595 = vld [vmem:[%s3] sm:$0x1]
        %597 = vset.pattern.permute.xlu0 0
        %598 = vperm.xlu0 %597, %v579
        %v599 = vpop.permute.xlu0 %598
        %602 = vset.pattern.permute.xlu0 0
        %603 = vperm.xlu0 %602, %v580
        %v604 = vpop.permute.xlu0 %603
        %607 = vset.pattern.permute.xlu0 0
        %608 = vperm.xlu0 %607, %v581
        %v609 = vpop.permute.xlu0 %608
        %612 = vset.pattern.permute.xlu0 0
        %613 = vperm.xlu0 %612, %v582
        %v614 = vpop.permute.xlu0 %613
        %617 = vset.pattern.permute.xlu0 0
        %618 = vperm.xlu0 %617, %v583
        %v619 = vpop.permute.xlu0 %618
        %622 = vset.pattern.permute.xlu0 0
        %623 = vperm.xlu0 %622, %v584
        %v624 = vpop.permute.xlu0 %623
        %627 = vset.pattern.permute.xlu0 0
        %628 = vperm.xlu0 %627, %v585
        %v629 = vpop.permute.xlu0 %628
        %632 = vset.pattern.permute.xlu0 0
        %633 = vperm.xlu0 %632, %v586
        %v634 = vpop.permute.xlu0 %633
        %637 = vset.pattern.permute.xlu0 0
        %638 = vperm.xlu0 %637, %v587
        %v639 = vpop.permute.xlu0 %638
        %642 = vset.pattern.permute.xlu0 0
        %643 = vperm.xlu0 %642, %v588
        %v644 = vpop.permute.xlu0 %643
        %647 = vset.pattern.permute.xlu0 0
        %648 = vperm.xlu0 %647, %v589
        %v649 = vpop.permute.xlu0 %648
        %652 = vset.pattern.permute.xlu0 0
        %653 = vperm.xlu0 %652, %v590
        %v654 = vpop.permute.xlu0 %653
        %657 = vset.pattern.permute.xlu0 0
        %658 = vperm.xlu0 %657, %v591
        %v659 = vpop.permute.xlu0 %658
        %662 = vset.pattern.permute.xlu0 0
        %663 = vperm.xlu0 %662, %v592
        %v664 = vpop.permute.xlu0 %663
        %667 = vset.pattern.permute.xlu0 0
        %668 = vperm.xlu0 %667, %v593
        %v669 = vpop.permute.xlu0 %668
        %672 = vset.pattern.permute.xlu0 0
        %673 = vperm.xlu0 %672, %v594
        %v674 = vpop.permute.xlu0 %673
        %v677 = vperm.slane %v595, 0
        %v679 = vmul.f32 %v599, %v677
        %v680 = vmul.f32 %v604, %v677
        %v681 = vmul.f32 %v609, %v677
        %v682 = vmul.f32 %v614, %v677
        %v683 = vmul.f32 %v619, %v677
        %v684 = vmul.f32 %v624, %v677
        %v685 = vmul.f32 %v629, %v677
        %v686 = vmul.f32 %v634, %v677
        %v687 = vmul.f32 %v639, %v677
        %v688 = vmul.f32 %v644, %v677
        %v689 = vmul.f32 %v649, %v677
        %v690 = vmul.f32 %v654, %v677
        %v691 = vmul.f32 %v659, %v677
        %v692 = vmul.f32 %v664, %v677
        %v693 = vmul.f32 %v669, %v677
        %v694 = vmul.f32 %v674, %v677
        %695 = vmatpush.msra.mxu0 %v578
        %696 = vmatpush.msra.mxu0 %v577
        %697 = vmatpush.msra.mxu0 %v576
        %698 = vmatpush.msra.mxu0 %v575
        %699 = vmatpush.msra.mxu0 %v574
        %700 = vmatpush.msra.mxu0 %v573
        %701 = vmatpush.msra.mxu0 %v572
        %702 = vmatpush.msra.mxu0 %v571
        %703 = vmatpush.msra.mxu0 %v570
        %704 = vmatpush.msra.mxu0 %v569
        %705 = vmatpush.msra.mxu0 %v568
        %706 = vmatpush.msra.mxu0 %v567
        %707 = vmatpush.msra.mxu0 %v566
        %708 = vmatpush.msra.mxu0 %v565
        %709 = vmatpush.msra.mxu0 %v564
        %710 = vmatpush.msra.mxu0 %v563
        %711 = vmatmul.f32.gmra.mxu0 %v547
        %v712 = vpop.f32.mrf.mxu0
        %v713 = vadd.f32 %v679, %v712
        %714 = vmatmul.f32.gmra.mxu0 %v548
        %v715 = vpop.f32.mrf.mxu0
        %v716 = vadd.f32 %v680, %v715
        %717 = vmatmul.f32.gmra.mxu0 %v549
        %v718 = vpop.f32.mrf.mxu0
        %v719 = vadd.f32 %v681, %v718
        %720 = vmatmul.f32.gmra.mxu0 %v550
        %v721 = vpop.f32.mrf.mxu0
        %v722 = vadd.f32 %v682, %v721
        %723 = vmatmul.f32.gmra.mxu0 %v551
        %v724 = vpop.f32.mrf.mxu0
        %v725 = vadd.f32 %v683, %v724
        %726 = vmatmul.f32.gmra.mxu0 %v552
        %v727 = vpop.f32.mrf.mxu0
        %v728 = vadd.f32 %v684, %v727
        %729 = vmatmul.f32.gmra.mxu0 %v553
        %v730 = vpop.f32.mrf.mxu0
        %v731 = vadd.f32 %v685, %v730
        %732 = vmatmul.f32.gmra.mxu0 %v554
        %v733 = vpop.f32.mrf.mxu0
        %v734 = vadd.f32 %v686, %v733
        %735 = vmatmul.f32.gmra.mxu0 %v555
        %v736 = vpop.f32.mrf.mxu0
        %v737 = vadd.f32 %v687, %v736
        %738 = vmatmul.f32.gmra.mxu0 %v556
        %v739 = vpop.f32.mrf.mxu0
        %v740 = vadd.f32 %v688, %v739
        %741 = vmatmul.f32.gmra.mxu0 %v557
        %v742 = vpop.f32.mrf.mxu0
        %v743 = vadd.f32 %v689, %v742
        %744 = vmatmul.f32.gmra.mxu0 %v558
        %v745 = vpop.f32.mrf.mxu0
        %v746 = vadd.f32 %v690, %v745
        %747 = vmatmul.f32.gmra.mxu0 %v559
        %v748 = vpop.f32.mrf.mxu0
        %v749 = vadd.f32 %v691, %v748
        %750 = vmatmul.f32.gmra.mxu0 %v560
        %v751 = vpop.f32.mrf.mxu0
        %v752 = vadd.f32 %v692, %v751
        %753 = vmatmul.f32.gmra.mxu0 %v561
        %v754 = vpop.f32.mrf.mxu0
        %v755 = vadd.f32 %v693, %v754
        %756 = vmatmul.f32.gmra.mxu0 %v562
        %v757 = vpop.f32.mrf.mxu0
        %v758 = vadd.f32 %v694, %v757
        %759 = vdwg.mxu0
        %v760 = vmax.f32 %v713, 0.0
        %v761 = vmax.f32 %v716, 0.0
        %v762 = vmax.f32 %v719, 0.0
        %v763 = vmax.f32 %v722, 0.0
        %v764 = vmax.f32 %v725, 0.0
        %v765 = vmax.f32 %v728, 0.0
        %v766 = vmax.f32 %v731, 0.0
        %v767 = vmax.f32 %v734, 0.0
        %v768 = vmax.f32 %v737, 0.0
        %v769 = vmax.f32 %v740, 0.0
        %v770 = vmax.f32 %v743, 0.0
        %v771 = vmax.f32 %v746, 0.0
        %v772 = vmax.f32 %v749, 0.0
        %v773 = vmax.f32 %v752, 0.0
        %v774 = vmax.f32 %v755, 0.0
        %v775 = vmax.f32 %v758, 0.0
        %776 = vst [vmem:[%s273] sm:$0xff] %v760
        %777 = vst [vmem:[%s273 + $0x8] sm:$0xff] %v761
        %778 = vst [vmem:[%s273 + $0x10] sm:$0xff] %v762
        %779 = vst [vmem:[%s273 + $0x18] sm:$0xff] %v763
        %780 = vst [vmem:[%s273 + $0x20] sm:$0xff] %v764
        %781 = vst [vmem:[%s273 + $0x28] sm:$0xff] %v765
        %782 = vst [vmem:[%s273 + $0x30] sm:$0xff] %v766
        %783 = vst [vmem:[%s273 + $0x38] sm:$0xff] %v767
        %784 = vst [vmem:[%s273 + $0x40] sm:$0xff] %v768
        %785 = vst [vmem:[%s273 + $0x48] sm:$0xff] %v769
        %786 = vst [vmem:[%s273 + $0x50] sm:$0xff] %v770
        %787 = vst [vmem:[%s273 + $0x58] sm:$0xff] %v771
        %788 = vst [vmem:[%s273 + $0x60] sm:$0xff] %v772
        %789 = vst [vmem:[%s273 + $0x68] sm:$0xff] %v773
        %790 = vst [vmem:[%s273 + $0x70] sm:$0xff] %v774
        %791 = vst [vmem:[%s273 + $0x78] sm:$0xff] %v775
      $region48: #{gcn_layer.1} parent=35 // pred_fallthru
        _
      %s792 = smul.u32 16, %s21
      %p793 = scmp.lt.s32.totalorder %s20, 1
      %s794 = scalar_select %p793, %s20, 1
      %p795 = scmp.lt.s32.totalorder %s792, 15
      %s796 = scalar_select %p795, %s792, 15
      %s797 = smul.addr %s794, 16
      %s798 = sadd.s32 %s796, %s797
      %s799 = smul.addr %s798, 8
      %s800 = scalar_lea.vmem %s4, %s799
      // Predicated region
      $region49: #{gcn_layer.1} parent=35 // pred_check
        %p801 = pneg %p152
      $region50: #{gcn_layer.1} parent=35 // pred_check_branch
        %803 = sbr.rel (%p801) target = $region52
      $region51: #{gcn_layer.1} parent=35 // pred_region
        %s804 = smul.u32 16, %s21
      $region52: #{gcn_layer.1} parent=35 // pred_fallthru
        _
    $region36: #{gcn_layer.1} parent=5 // pred_fallthru
      _
    %p805 = scmp.le.s32.totalorder 2, %s10
    // Predicated region
    $region53: #{gcn_layer.1} parent=5 // pred_check
      %p806 = pneg %p805
    $region54: #{gcn_layer.1} parent=5 // pred_check_branch
      %808 = sbr.rel (%p806) target = $region56
    $region55: #{gcn_layer.1} parent=5 // pred_region
      %s809 = ssub.s32 %s10, 2
      // Predicated region
      $region57: #{gcn_layer.1} parent=55 // pred_check
        %p810 = pneg %p158
      $region58: #{gcn_layer.1} parent=55 // pred_check_branch
        %812 = sbr.rel (%p810) target = $region60
      $region59: #{gcn_layer.1} parent=55 // pred_region
        %s813 = smul.u32 16, %s24
        %p814 = scmp.lt.s32.totalorder %s23, 1
        %s815 = scalar_select %p814, %s23, 1
        %p816 = scmp.lt.s32.totalorder %s813, 15
        %s817 = scalar_select %p816, %s813, 15
        %s818 = smul.addr %s815, 16
        %s819 = sadd.s32 %s817, %s818
        %s820 = smul.addr %s819, 8
        %s821 = scalar_lea.vmem %s4, %s820
      $region60: #{gcn_layer.1} parent=55 // pred_fallthru
        _
    $region56: #{gcn_layer.1} parent=5 // pred_fallthru
      _
  $region6: #{gcn_layer.1} parent=0 // loop_footer
    %s14 = sadd.s32 1, %s10
  $region7: #{gcn_layer.1} parent=0 // loop_footer_branch
    %9 = sbr.rel target = $region3
  $region8: #{gcn_layer.1} parent=0 // loop_exit
    _

</llo_original>
